<compile_context>
chip_gen: v5e
topology: v5e:2x2
jax: 0.10.0
libtpu: 0.0.40
codegen_flags: <defaults>
</compile_context>

<pallas_src>
import functools
import math

import jax
import jax.numpy as jnp
from jax.experimental import pallas as pl
from jax.experimental.pallas import tpu as pltpu


def _pick_batch_tile(batch, seq, target_rows=256):
    """Largest divisor of `batch` with bt*seq <= target_rows (MXU row fill),
    preferring >=2 grid steps so v7x's two TensorCores both get work."""
    divisors = [d for d in range(1, batch + 1) if batch % d == 0]
    cap = max(1, target_rows // max(seq, 1))
    fitting = [d for d in divisors if d <= cap] or [1]
    bt = max(fitting)
    if batch // bt < 2 and batch >= 2:
        two_step = [d for d in fitting if batch // d >= 2]
        if two_step:
            bt = max(two_step)
    return bt


def prepare_params(params, compute_dtype=jnp.bfloat16):
    """One-time weight preparation (NOT per forward call):
      - fuse per-head Q/K/V weights into one (Din, 3*H*D) matrix,
      - flatten W0 to (H*D, Din),
      - cast matmul operands to the MXU compute dtype,
      - fold the 1/sqrt(D) attention scale into the Q columns and Q bias."""
    wq, bq = params["wq"], params["bq"]          # (H, Din, D), (H, 1, D)
    wk, bk = params["wk"], params["bk"]
    wv, bv = params["wv"], params["bv"]
    w0, b0 = params["w0"], params["b0"]          # (H, D, Din), (1, Din)

    H, Din, D = wq.shape
    HD = H * D
    scale = 1.0 / math.sqrt(D)

    def fuse(w):                                  # (H, Din, D) -> (Din, H*D)
        return jnp.transpose(w, (1, 0, 2)).reshape(Din, HD)

    w_qkv = jnp.concatenate([fuse(wq) * scale, fuse(wk), fuse(wv)], axis=-1)
    b_qkv = jnp.concatenate([bq.reshape(HD) * scale, bk.reshape(HD),
                             bv.reshape(HD)]).reshape(1, 3 * HD)

    return {
        "w_qkv": w_qkv.astype(compute_dtype),              # (Din, 3*H*D)
        "b_qkv": b_qkv.astype(jnp.float32),                # (1, 3*H*D)
        "w0": w0.reshape(HD, Din).astype(compute_dtype),   # (H*D, Din)
        "b0": b0.reshape(1, Din).astype(jnp.float32),      # (1, Din)
        "num_heads": H,
        "head_dim": D,
    }


def _mha_kernel(*refs, num_heads, head_dim, approx_recip, has_mask):
    if has_mask:
        x_ref, wqkv_ref, bqkv_ref, w0_ref, b0_ref, mask_ref, out_ref = refs
    else:
        x_ref, wqkv_ref, bqkv_ref, w0_ref, b0_ref, out_ref = refs
        mask_ref = None

    H, D = num_heads, head_dim
    HD = H * D
    bt, S, Din = x_ref.shape
    M = bt * S

    # (bt, S, Din) -> (M, Din): leading-dim merge (S % 8 == 0 -> no relayout).
    x = x_ref[...].reshape(M, Din).astype(jnp.bfloat16)

    # Fused Q|K|V projection: ONE MXU matmul over M rows.  1/sqrt(D) and the
    # biases were folded in by prepare_params.
    qkv = jnp.dot(x, wqkv_ref[...], preferred_element_type=jnp.float32)
    qkv = qkv + bqkv_ref[...]                               # (M, 3*H*D) f32

    acc = None                                              # (M, Din) f32
    # Per-head loop unrolled at trace time (H static & small).  At realistic
    # head_dim (>=128) these column slices are lane-aligned vreg selects.
    for h in range(H):
        q = qkv[:, h * D:(h + 1) * D]
        k = qkv[:, HD + h * D:HD + (h + 1) * D]
        v = qkv[:, 2 * HD + h * D:2 * HD + (h + 1) * D]
        # (M, D) -> (bt, S, D): leading-dim split, free.
        qb = q.reshape(bt, S, D).astype(jnp.bfloat16)
        kb = k.reshape(bt, S, D).astype(jnp.bfloat16)
        vb = v.reshape(bt, S, D).astype(jnp.bfloat16)

        # Scores batched over the batch tile (single batch dim).
        s = jnp.einsum("bqd,bkd->bqk", qb, kb,
                       preferred_element_type=jnp.float32)  # (bt, S, S) f32
        if has_mask:
            s = s + mask_ref[...]
        # TODO(synk): if a mask with fully -inf rows is ever supplied, guard
        # the softmax (such rows produce NaN, matching the PyTorch reference).
        s = s - jnp.max(s, axis=-1, keepdims=True)
        p = jnp.exp(s)
        denom = jnp.sum(p, axis=-1, keepdims=True)
        if approx_recip:
            # EUP vrcp (free slot); ~1e-3 relative error on the normalization.
            p = p * pl.reciprocal(denom, approx=True)
        else:
            p = p / denom

        o = jnp.einsum("bqk,bkd->bqd", p.astype(jnp.bfloat16), vb,
                       preferred_element_type=jnp.float32)  # (bt, S, D)

        # Accumulate this head through its 16-row block of W0 (bf16
        # sublane-tile aligned) -- no lane-direction concat of head outputs.
        contrib = jnp.dot(o.reshape(M, D).astype(jnp.bfloat16),
                          w0_ref[h * D:(h + 1) * D, :],
                          preferred_element_type=jnp.float32)   # (M, Din)
        acc = contrib if acc is None else acc + contrib

    out = acc + b0_ref[...]                                 # (M, Din) f32
    out_ref[...] = out.reshape(bt, S, Din).astype(out_ref.dtype)


def multi_head_masked_attention(x, prepared, mask=None, *, batch_tile=None,
                                approx_softmax_recip=True):
    """x: (B, S, Din) f32.  `prepared` comes from prepare_params().
    mask: optional (S, S) additive f32 mask.  The PyTorch module's forward
    never supplies one (equivalent to a zero mask)."""
    B, S, Din = x.shape
    H, D = prepared["num_heads"], prepared["head_dim"]
    HD = H * D
    w_qkv, b_qkv = prepared["w_qkv"], prepared["b_qkv"]
    w0, b0 = prepared["w0"], prepared["b0"]
    assert w_qkv.shape == (Din, 3 * HD) and w0.shape == (HD, Din)

    bt = batch_tile if batch_tile is not None else _pick_batch_tile(B, S)
    assert B % bt == 0, (B, bt)
    grid = (B // bt,)

    has_mask = mask is not None
    kernel = functools.partial(_mha_kernel, num_heads=H, head_dim=D,
                               approx_recip=approx_softmax_recip,
                               has_mask=has_mask)

    # Weight/bias index maps are constant: their blocks are DMAed once and
    # never re-fetched across grid steps.  (At realistic dims they could also
    # be single-buffered via pipeline_mode=pl.Buffered(1) to halve their VMEM
    # footprint; unnecessary at these sizes.)
    in_specs = [
        pl.BlockSpec((bt, S, Din), lambda b: (b, 0, 0)),    # x batch tile
        pl.BlockSpec((Din, 3 * HD), lambda b: (0, 0)),      # fused W_qkv
        pl.BlockSpec((1, 3 * HD), lambda b: (0, 0)),        # fused bias_qkv
        pl.BlockSpec((HD, Din), lambda b: (0, 0)),          # W0 (flat)
        pl.BlockSpec((1, Din), lambda b: (0, 0)),           # b0
    ]
    operands = [x, w_qkv, b_qkv, w0, b0]
    if has_mask:
        in_specs.append(pl.BlockSpec((S, S), lambda b: (0, 0)))
        operands.append(mask.astype(jnp.float32))

    # TODO(synk): for long sequences add a grid axis over S with a flash-style
    # online softmax over K/V tiles (needed to fit v7x's 64 MiB VMEM at scale).
    return pl.pallas_call(
        kernel,
        out_shape=jax.ShapeDtypeStruct((B, S, Din), jnp.float32),
        grid=grid,
        in_specs=in_specs,
        out_specs=pl.BlockSpec((bt, S, Din), lambda b: (b, 0, 0)),
        compiler_params=pltpu.CompilerParams(
            dimension_semantics=("parallel",),        # batch tiles across TCs
            vmem_limit_bytes=32 * 1024 * 1024),       # explicit scoped-VMEM cap
    )(*operands)


def _reference(x, params, mask=None):
    """Pure-JAX reference mirroring the PyTorch forward."""
    wq, bq = params["wq"], params["bq"]
    wk, bk = params["wk"], params["bk"]
    wv, bv = params["wv"], params["bv"]
    w0, b0 = params["w0"], params["b0"]
    H, _, D = wq.shape
    outs = []
    for h in range(H):
        q = x @ wq[h] + bq[h]
        k = x @ wk[h] + bk[h]
        v = x @ wv[h] + bv[h]
        s = (q @ jnp.swapaxes(k, 1, 2)) / math.sqrt(D)
        if mask is not None:
            s = s + mask
        p = jax.nn.softmax(s, axis=-1)
        outs.append(p @ v)
    cat = jnp.concatenate(outs, axis=-1)                 # (B, S, H*D)
    return cat @ w0.reshape(H * D, -1) + b0


def init_params(key, input_dim, output_dim, num_heads):
    ks = jax.random.split(key, 8)

    def u(k, shape, fan_in):
        bound = 1.0 / math.sqrt(fan_in)
        return jax.random.uniform(k, shape, jnp.float32, -bound, bound)

    return {
        "wq": u(ks[0], (num_heads, input_dim, output_dim), input_dim),
        "bq": u(ks[1], (num_heads, 1, output_dim), input_dim),
        "wk": u(ks[2], (num_heads, input_dim, output_dim), input_dim),
        "bk": u(ks[3], (num_heads, 1, output_dim), input_dim),
        "wv": u(ks[4], (num_heads, input_dim, output_dim), input_dim),
        "bv": u(ks[5], (num_heads, 1, output_dim), input_dim),
        # W0: nn.Linear(H*D, Din) weight stored transposed per head.
        "w0": u(ks[6], (num_heads, output_dim, input_dim),
                num_heads * output_dim),
        "b0": u(ks[7], (1, input_dim), num_heads * output_dim),
    }


if __name__ == "__main__":
    B, S = 4, 8
    input_dim, output_dim, num_heads = 32, 16, 4

    key = jax.random.PRNGKey(0)
    kx, kp = jax.random.split(key)
    x = jax.random.normal(kx, (B, S, input_dim), jnp.float32)
    params = init_params(kp, input_dim, output_dim, num_heads)

    prepared = prepare_params(params)     # one-time weight fusion / cast

    # MultiHeadMaskedAttention.forward never supplies a mask; mask=None here
    # is equivalent to a zero additive mask.
    out = multi_head_masked_attention(x, prepared, mask=None)
    out = jax.block_until_ready(out)

    ref = _reference(x, params, mask=None)
    assert out.shape == (B, S, input_dim)
    # bf16 MXU operands + approx softmax reciprocal -> looser tolerance.
    err = float(jnp.max(jnp.abs(out - ref)))
    assert jnp.allclose(out, ref, atol=2e-2, rtol=2e-2), err

    print("KERNEL_OK")
</pallas_src>

<mosaic_0001>
module attributes {stable_mosaic.version = 11 : i64} {
  func.func @_mha_kernel(%arg0: i32, %arg1: memref<2x8x32xf32, #tpu.memory_space<vmem>>, %arg2: memref<32x192xbf16, #tpu.memory_space<vmem>>, %arg3: memref<1x192xf32, #tpu.memory_space<vmem>>, %arg4: memref<64x32xbf16, #tpu.memory_space<vmem>>, %arg5: memref<1x32xf32, #tpu.memory_space<vmem>>, %arg6: memref<2x8x32xf32, #tpu.memory_space<vmem>>) attributes {dimension_semantics = [#tpu.dimension_semantics<parallel>], iteration_bounds = array<i64: 2>, scalar_prefetch = 0 : i64, scratch_operands = 0 : i64, tpu.core_type = #tpu.core_type<tc>, window_params = [{transform_indices = @transform_0, window_bounds = array<i64: 2, 8, 32>}, {pipeline_mode = #tpu.pipeline_mode<synchronous>, transform_indices = @transform_1, window_bounds = array<i64: 32, 192>}, {pipeline_mode = #tpu.pipeline_mode<synchronous>, transform_indices = @transform_2, window_bounds = array<i64: 1, 192>}, {pipeline_mode = #tpu.pipeline_mode<synchronous>, transform_indices = @transform_3, window_bounds = array<i64: 64, 32>}, {pipeline_mode = #tpu.pipeline_mode<synchronous>, transform_indices = @transform_4, window_bounds = array<i64: 1, 32>}, {transform_indices = @transform_5, window_bounds = array<i64: 2, 8, 32>}]} {
    %c0 = arith.constant 0 : index
    %c0_0 = arith.constant 0 : index
    %c0_1 = arith.constant 0 : index
    %0 = vector.load %arg1[%c0, %c0_0, %c0_1] : memref<2x8x32xf32, #tpu.memory_space<vmem>>, vector<2x8x32xf32>
    %1 = vector.shape_cast %0 : vector<2x8x32xf32> to vector<16x32xf32>
    %2 = arith.truncf %1 : vector<16x32xf32> to vector<16x32xbf16>
    %c0_2 = arith.constant 0 : index
    %c0_3 = arith.constant 0 : index
    %3 = vector.load %arg2[%c0_2, %c0_3] : memref<32x192xbf16, #tpu.memory_space<vmem>>, vector<32x192xbf16>
    %cst = arith.constant dense<0.000000e+00> : vector<16x192xf32>
    %4 = tpu.matmul %2, %3, %cst {dimension_numbers = #tpu.dot_dimension_numbers<[1], [0], [0], [1], [0, 0, 1, 1], [], []>} : vector<16x32xbf16>, vector<32x192xbf16>, vector<16x192xf32> -> vector<16x192xf32>
    %c0_4 = arith.constant 0 : index
    %c0_5 = arith.constant 0 : index
    %5 = vector.load %arg3[%c0_4, %c0_5] : memref<1x192xf32, #tpu.memory_space<vmem>>, vector<1x192xf32>
    %6 = vector.broadcast %5 : vector<1x192xf32> to vector<16x192xf32>
    %7 = arith.addf %4, %6 : vector<16x192xf32>
    %8 = vector.extract_strided_slice %7 {offsets = [0, 0], sizes = [16, 16], strides = [1, 1]} : vector<16x192xf32> to vector<16x16xf32>
    %9 = vector.extract_strided_slice %7 {offsets = [0, 64], sizes = [16, 16], strides = [1, 1]} : vector<16x192xf32> to vector<16x16xf32>
    %10 = vector.extract_strided_slice %7 {offsets = [0, 128], sizes = [16, 16], strides = [1, 1]} : vector<16x192xf32> to vector<16x16xf32>
    %11 = vector.shape_cast %8 : vector<16x16xf32> to vector<2x8x16xf32>
    %12 = arith.truncf %11 : vector<2x8x16xf32> to vector<2x8x16xbf16>
    %13 = vector.shape_cast %9 : vector<16x16xf32> to vector<2x8x16xf32>
    %14 = arith.truncf %13 : vector<2x8x16xf32> to vector<2x8x16xbf16>
    %15 = vector.shape_cast %10 : vector<16x16xf32> to vector<2x8x16xf32>
    %16 = arith.truncf %15 : vector<2x8x16xf32> to vector<2x8x16xbf16>
    "tpu.trace_start"() <{level = 10 : i32, message = "bqd,bkd->bqk"}> : () -> ()
    %cst_6 = arith.constant dense<0.000000e+00> : vector<2x8x8xf32>
    %17 = tpu.matmul %12, %14, %cst_6 {dimension_numbers = #tpu.dot_dimension_numbers<[2], [2], [1], [1], [0, 0, 0, 1, 1, 1], [0], [0]>} : vector<2x8x16xbf16>, vector<2x8x16xbf16>, vector<2x8x8xf32> -> vector<2x8x8xf32>
    "tpu.trace_stop"() : () -> ()
    %cst_7 = arith.constant dense<0xFF800000> : vector<2x8xf32>
    %18 = vector.multi_reduction <maximumf>, %17, %cst_7 [2] : vector<2x8x8xf32> to vector<2x8xf32>
    %19 = vector.shape_cast %18 : vector<2x8xf32> to vector<2x8x1xf32>
    %20 = vector.broadcast %19 : vector<2x8x1xf32> to vector<2x8x8xf32>
    %21 = arith.subf %17, %20 : vector<2x8x8xf32>
    %22 = math.exp %21 : vector<2x8x8xf32>
    %cst_8 = arith.constant dense<0.000000e+00> : vector<2x8xf32>
    %23 = vector.multi_reduction <add>, %22, %cst_8 [2] : vector<2x8x8xf32> to vector<2x8xf32>
    %24 = vector.shape_cast %23 : vector<2x8xf32> to vector<2x8x1xf32>
    %25 = tpu.reciprocal %24 {approx = true} : vector<2x8x1xf32> -> vector<2x8x1xf32>
    %26 = vector.broadcast %25 : vector<2x8x1xf32> to vector<2x8x8xf32>
    %27 = arith.mulf %22, %26 : vector<2x8x8xf32>
    %28 = arith.truncf %27 : vector<2x8x8xf32> to vector<2x8x8xbf16>
    "tpu.trace_start"() <{level = 10 : i32, message = "bqk,bkd->bqd"}> : () -> ()
    %cst_9 = arith.constant dense<0.000000e+00> : vector<2x8x16xf32>
    %29 = tpu.matmul %28, %16, %cst_9 {dimension_numbers = #tpu.dot_dimension_numbers<[2], [1], [1], [2], [0, 0, 0, 1, 1, 2], [0], [0]>} : vector<2x8x8xbf16>, vector<2x8x16xbf16>, vector<2x8x16xf32> -> vector<2x8x16xf32>
    "tpu.trace_stop"() : () -> ()
    %30 = vector.shape_cast %29 : vector<2x8x16xf32> to vector<16x16xf32>
    %31 = arith.truncf %30 : vector<16x16xf32> to vector<16x16xbf16>
    %c0_10 = arith.constant 0 : index
    %c0_11 = arith.constant 0 : index
    %32 = vector.load %arg4[%c0_10, %c0_11] : memref<64x32xbf16, #tpu.memory_space<vmem>>, vector<16x32xbf16>
    %cst_12 = arith.constant dense<0.000000e+00> : vector<16x32xf32>
    %33 = tpu.matmul %31, %32, %cst_12 {dimension_numbers = #tpu.dot_dimension_numbers<[1], [0], [0], [1], [0, 0, 1, 1], [], []>} : vector<16x16xbf16>, vector<16x32xbf16>, vector<16x32xf32> -> vector<16x32xf32>
    %34 = vector.extract_strided_slice %7 {offsets = [0, 16], sizes = [16, 16], strides = [1, 1]} : vector<16x192xf32> to vector<16x16xf32>
    %35 = vector.extract_strided_slice %7 {offsets = [0, 80], sizes = [16, 16], strides = [1, 1]} : vector<16x192xf32> to vector<16x16xf32>
    %36 = vector.extract_strided_slice %7 {offsets = [0, 144], sizes = [16, 16], strides = [1, 1]} : vector<16x192xf32> to vector<16x16xf32>
    %37 = vector.shape_cast %34 : vector<16x16xf32> to vector<2x8x16xf32>
    %38 = arith.truncf %37 : vector<2x8x16xf32> to vector<2x8x16xbf16>
    %39 = vector.shape_cast %35 : vector<16x16xf32> to vector<2x8x16xf32>
    %40 = arith.truncf %39 : vector<2x8x16xf32> to vector<2x8x16xbf16>
    %41 = vector.shape_cast %36 : vector<16x16xf32> to vector<2x8x16xf32>
    %42 = arith.truncf %41 : vector<2x8x16xf32> to vector<2x8x16xbf16>
    "tpu.trace_start"() <{level = 10 : i32, message = "bqd,bkd->bqk"}> : () -> ()
    %cst_13 = arith.constant dense<0.000000e+00> : vector<2x8x8xf32>
    %43 = tpu.matmul %38, %40, %cst_13 {dimension_numbers = #tpu.dot_dimension_numbers<[2], [2], [1], [1], [0, 0, 0, 1, 1, 1], [0], [0]>} : vector<2x8x16xbf16>, vector<2x8x16xbf16>, vector<2x8x8xf32> -> vector<2x8x8xf32>
    "tpu.trace_stop"() : () -> ()
    %cst_14 = arith.constant dense<0xFF800000> : vector<2x8xf32>
    %44 = vector.multi_reduction <maximumf>, %43, %cst_14 [2] : vector<2x8x8xf32> to vector<2x8xf32>
    %45 = vector.shape_cast %44 : vector<2x8xf32> to vector<2x8x1xf32>
    %46 = vector.broadcast %45 : vector<2x8x1xf32> to vector<2x8x8xf32>
    %47 = arith.subf %43, %46 : vector<2x8x8xf32>
    %48 = math.exp %47 : vector<2x8x8xf32>
    %cst_15 = arith.constant dense<0.000000e+00> : vector<2x8xf32>
    %49 = vector.multi_reduction <add>, %48, %cst_15 [2] : vector<2x8x8xf32> to vector<2x8xf32>
    %50 = vector.shape_cast %49 : vector<2x8xf32> to vector<2x8x1xf32>
    %51 = tpu.reciprocal %50 {approx = true} : vector<2x8x1xf32> -> vector<2x8x1xf32>
    %52 = vector.broadcast %51 : vector<2x8x1xf32> to vector<2x8x8xf32>
    %53 = arith.mulf %48, %52 : vector<2x8x8xf32>
    %54 = arith.truncf %53 : vector<2x8x8xf32> to vector<2x8x8xbf16>
    "tpu.trace_start"() <{level = 10 : i32, message = "bqk,bkd->bqd"}> : () -> ()
    %cst_16 = arith.constant dense<0.000000e+00> : vector<2x8x16xf32>
    %55 = tpu.matmul %54, %42, %cst_16 {dimension_numbers = #tpu.dot_dimension_numbers<[2], [1], [1], [2], [0, 0, 0, 1, 1, 2], [0], [0]>} : vector<2x8x8xbf16>, vector<2x8x16xbf16>, vector<2x8x16xf32> -> vector<2x8x16xf32>
    "tpu.trace_stop"() : () -> ()
    %56 = vector.shape_cast %55 : vector<2x8x16xf32> to vector<16x16xf32>
    %57 = arith.truncf %56 : vector<16x16xf32> to vector<16x16xbf16>
    %c16 = arith.constant 16 : index
    %c0_17 = arith.constant 0 : index
    %58 = vector.load %arg4[%c16, %c0_17] : memref<64x32xbf16, #tpu.memory_space<vmem>>, vector<16x32xbf16>
    %cst_18 = arith.constant dense<0.000000e+00> : vector<16x32xf32>
    %59 = tpu.matmul %57, %58, %cst_18 {dimension_numbers = #tpu.dot_dimension_numbers<[1], [0], [0], [1], [0, 0, 1, 1], [], []>} : vector<16x16xbf16>, vector<16x32xbf16>, vector<16x32xf32> -> vector<16x32xf32>
    %60 = arith.addf %33, %59 : vector<16x32xf32>
    %61 = vector.extract_strided_slice %7 {offsets = [0, 32], sizes = [16, 16], strides = [1, 1]} : vector<16x192xf32> to vector<16x16xf32>
    %62 = vector.extract_strided_slice %7 {offsets = [0, 96], sizes = [16, 16], strides = [1, 1]} : vector<16x192xf32> to vector<16x16xf32>
    %63 = vector.extract_strided_slice %7 {offsets = [0, 160], sizes = [16, 16], strides = [1, 1]} : vector<16x192xf32> to vector<16x16xf32>
    %64 = vector.shape_cast %61 : vector<16x16xf32> to vector<2x8x16xf32>
    %65 = arith.truncf %64 : vector<2x8x16xf32> to vector<2x8x16xbf16>
    %66 = vector.shape_cast %62 : vector<16x16xf32> to vector<2x8x16xf32>
    %67 = arith.truncf %66 : vector<2x8x16xf32> to vector<2x8x16xbf16>
    %68 = vector.shape_cast %63 : vector<16x16xf32> to vector<2x8x16xf32>
    %69 = arith.truncf %68 : vector<2x8x16xf32> to vector<2x8x16xbf16>
    "tpu.trace_start"() <{level = 10 : i32, message = "bqd,bkd->bqk"}> : () -> ()
    %cst_19 = arith.constant dense<0.000000e+00> : vector<2x8x8xf32>
    %70 = tpu.matmul %65, %67, %cst_19 {dimension_numbers = #tpu.dot_dimension_numbers<[2], [2], [1], [1], [0, 0, 0, 1, 1, 1], [0], [0]>} : vector<2x8x16xbf16>, vector<2x8x16xbf16>, vector<2x8x8xf32> -> vector<2x8x8xf32>
    "tpu.trace_stop"() : () -> ()
    %cst_20 = arith.constant dense<0xFF800000> : vector<2x8xf32>
    %71 = vector.multi_reduction <maximumf>, %70, %cst_20 [2] : vector<2x8x8xf32> to vector<2x8xf32>
    %72 = vector.shape_cast %71 : vector<2x8xf32> to vector<2x8x1xf32>
    %73 = vector.broadcast %72 : vector<2x8x1xf32> to vector<2x8x8xf32>
    %74 = arith.subf %70, %73 : vector<2x8x8xf32>
    %75 = math.exp %74 : vector<2x8x8xf32>
    %cst_21 = arith.constant dense<0.000000e+00> : vector<2x8xf32>
    %76 = vector.multi_reduction <add>, %75, %cst_21 [2] : vector<2x8x8xf32> to vector<2x8xf32>
    %77 = vector.shape_cast %76 : vector<2x8xf32> to vector<2x8x1xf32>
    %78 = tpu.reciprocal %77 {approx = true} : vector<2x8x1xf32> -> vector<2x8x1xf32>
    %79 = vector.broadcast %78 : vector<2x8x1xf32> to vector<2x8x8xf32>
    %80 = arith.mulf %75, %79 : vector<2x8x8xf32>
    %81 = arith.truncf %80 : vector<2x8x8xf32> to vector<2x8x8xbf16>
    "tpu.trace_start"() <{level = 10 : i32, message = "bqk,bkd->bqd"}> : () -> ()
    %cst_22 = arith.constant dense<0.000000e+00> : vector<2x8x16xf32>
    %82 = tpu.matmul %81, %69, %cst_22 {dimension_numbers = #tpu.dot_dimension_numbers<[2], [1], [1], [2], [0, 0, 0, 1, 1, 2], [0], [0]>} : vector<2x8x8xbf16>, vector<2x8x16xbf16>, vector<2x8x16xf32> -> vector<2x8x16xf32>
    "tpu.trace_stop"() : () -> ()
    %83 = vector.shape_cast %82 : vector<2x8x16xf32> to vector<16x16xf32>
    %84 = arith.truncf %83 : vector<16x16xf32> to vector<16x16xbf16>
    %c32 = arith.constant 32 : index
    %c0_23 = arith.constant 0 : index
    %85 = vector.load %arg4[%c32, %c0_23] : memref<64x32xbf16, #tpu.memory_space<vmem>>, vector<16x32xbf16>
    %cst_24 = arith.constant dense<0.000000e+00> : vector<16x32xf32>
    %86 = tpu.matmul %84, %85, %cst_24 {dimension_numbers = #tpu.dot_dimension_numbers<[1], [0], [0], [1], [0, 0, 1, 1], [], []>} : vector<16x16xbf16>, vector<16x32xbf16>, vector<16x32xf32> -> vector<16x32xf32>
    %87 = arith.addf %60, %86 : vector<16x32xf32>
    %88 = vector.extract_strided_slice %7 {offsets = [0, 48], sizes = [16, 16], strides = [1, 1]} : vector<16x192xf32> to vector<16x16xf32>
    %89 = vector.extract_strided_slice %7 {offsets = [0, 112], sizes = [16, 16], strides = [1, 1]} : vector<16x192xf32> to vector<16x16xf32>
    %90 = vector.extract_strided_slice %7 {offsets = [0, 176], sizes = [16, 16], strides = [1, 1]} : vector<16x192xf32> to vector<16x16xf32>
    %91 = vector.shape_cast %88 : vector<16x16xf32> to vector<2x8x16xf32>
    %92 = arith.truncf %91 : vector<2x8x16xf32> to vector<2x8x16xbf16>
    %93 = vector.shape_cast %89 : vector<16x16xf32> to vector<2x8x16xf32>
    %94 = arith.truncf %93 : vector<2x8x16xf32> to vector<2x8x16xbf16>
    %95 = vector.shape_cast %90 : vector<16x16xf32> to vector<2x8x16xf32>
    %96 = arith.truncf %95 : vector<2x8x16xf32> to vector<2x8x16xbf16>
    "tpu.trace_start"() <{level = 10 : i32, message = "bqd,bkd->bqk"}> : () -> ()
    %cst_25 = arith.constant dense<0.000000e+00> : vector<2x8x8xf32>
    %97 = tpu.matmul %92, %94, %cst_25 {dimension_numbers = #tpu.dot_dimension_numbers<[2], [2], [1], [1], [0, 0, 0, 1, 1, 1], [0], [0]>} : vector<2x8x16xbf16>, vector<2x8x16xbf16>, vector<2x8x8xf32> -> vector<2x8x8xf32>
    "tpu.trace_stop"() : () -> ()
    %cst_26 = arith.constant dense<0xFF800000> : vector<2x8xf32>
    %98 = vector.multi_reduction <maximumf>, %97, %cst_26 [2] : vector<2x8x8xf32> to vector<2x8xf32>
    %99 = vector.shape_cast %98 : vector<2x8xf32> to vector<2x8x1xf32>
    %100 = vector.broadcast %99 : vector<2x8x1xf32> to vector<2x8x8xf32>
    %101 = arith.subf %97, %100 : vector<2x8x8xf32>
    %102 = math.exp %101 : vector<2x8x8xf32>
    %cst_27 = arith.constant dense<0.000000e+00> : vector<2x8xf32>
    %103 = vector.multi_reduction <add>, %102, %cst_27 [2] : vector<2x8x8xf32> to vector<2x8xf32>
    %104 = vector.shape_cast %103 : vector<2x8xf32> to vector<2x8x1xf32>
    %105 = tpu.reciprocal %104 {approx = true} : vector<2x8x1xf32> -> vector<2x8x1xf32>
    %106 = vector.broadcast %105 : vector<2x8x1xf32> to vector<2x8x8xf32>
    %107 = arith.mulf %102, %106 : vector<2x8x8xf32>
    %108 = arith.truncf %107 : vector<2x8x8xf32> to vector<2x8x8xbf16>
    "tpu.trace_start"() <{level = 10 : i32, message = "bqk,bkd->bqd"}> : () -> ()
    %cst_28 = arith.constant dense<0.000000e+00> : vector<2x8x16xf32>
    %109 = tpu.matmul %108, %96, %cst_28 {dimension_numbers = #tpu.dot_dimension_numbers<[2], [1], [1], [2], [0, 0, 0, 1, 1, 2], [0], [0]>} : vector<2x8x8xbf16>, vector<2x8x16xbf16>, vector<2x8x16xf32> -> vector<2x8x16xf32>
    "tpu.trace_stop"() : () -> ()
    %110 = vector.shape_cast %109 : vector<2x8x16xf32> to vector<16x16xf32>
    %111 = arith.truncf %110 : vector<16x16xf32> to vector<16x16xbf16>
    %c48 = arith.constant 48 : index
    %c0_29 = arith.constant 0 : index
    %112 = vector.load %arg4[%c48, %c0_29] : memref<64x32xbf16, #tpu.memory_space<vmem>>, vector<16x32xbf16>
    %cst_30 = arith.constant dense<0.000000e+00> : vector<16x32xf32>
    %113 = tpu.matmul %111, %112, %cst_30 {dimension_numbers = #tpu.dot_dimension_numbers<[1], [0], [0], [1], [0, 0, 1, 1], [], []>} : vector<16x16xbf16>, vector<16x32xbf16>, vector<16x32xf32> -> vector<16x32xf32>
    %114 = arith.addf %87, %113 : vector<16x32xf32>
    %c0_31 = arith.constant 0 : index
    %c0_32 = arith.constant 0 : index
    %115 = vector.load %arg5[%c0_31, %c0_32] : memref<1x32xf32, #tpu.memory_space<vmem>>, vector<1x32xf32>
    %116 = vector.broadcast %115 : vector<1x32xf32> to vector<16x32xf32>
    %117 = arith.addf %114, %116 : vector<16x32xf32>
    %118 = vector.shape_cast %117 : vector<16x32xf32> to vector<2x8x32xf32>
    %c0_33 = arith.constant 0 : index
    %c0_34 = arith.constant 0 : index
    %c0_35 = arith.constant 0 : index
    %119 = vector.load %arg6[%c0_33, %c0_34, %c0_35] : memref<2x8x32xf32, #tpu.memory_space<vmem>>, vector<2x8x32xf32>
    tpu.vector_store %arg6[%c0_33, %c0_34, %c0_35], %118 {strides = array<i32>} : memref<2x8x32xf32, #tpu.memory_space<vmem>>, vector<2x8x32xf32>,
    return
  }
  func.func @transform_0(%arg0: i32) -> (i32, i32, i32) {
    %c0_i32 = arith.constant 0 : i32
    %c0_i32_0 = arith.constant 0 : i32
    %c0_i32_1 = arith.constant 0 : i32
    return %arg0, %c0_i32, %c0_i32_0 : i32, i32, i32
  }
  func.func @transform_1(%arg0: i32) -> (i32, i32) {
    %c0_i32 = arith.constant 0 : i32
    %c0_i32_0 = arith.constant 0 : i32
    %c0_i32_1 = arith.constant 0 : i32
    return %c0_i32, %c0_i32_0 : i32, i32
  }
  func.func @transform_2(%arg0: i32) -> (i32, i32) {
    %c0_i32 = arith.constant 0 : i32
    %c0_i32_0 = arith.constant 0 : i32
    %c0_i32_1 = arith.constant 0 : i32
    return %c0_i32, %c0_i32_0 : i32, i32
  }
  func.func @transform_3(%arg0: i32) -> (i32, i32) {
    %c0_i32 = arith.constant 0 : i32
    %c0_i32_0 = arith.constant 0 : i32
    %c0_i32_1 = arith.constant 0 : i32
    return %c0_i32, %c0_i32_0 : i32, i32
  }
  func.func @transform_4(%arg0: i32) -> (i32, i32) {
    %c0_i32 = arith.constant 0 : i32
    %c0_i32_0 = arith.constant 0 : i32
    %c0_i32_1 = arith.constant 0 : i32
    return %c0_i32, %c0_i32_0 : i32, i32
  }
  func.func @transform_5(%arg0: i32) -> (i32, i32, i32) {
    %c0_i32 = arith.constant 0 : i32
    %c0_i32_0 = arith.constant 0 : i32
    %c0_i32_1 = arith.constant 0 : i32
    return %arg0, %c0_i32, %c0_i32_0 : i32, i32, i32
  }
}

</mosaic_0001>

<llo_original>
// kernel: tpu_custom_call.1
$region0: #{tpu_custom_call.1}
  #allocation0 [shape = 'u32[]', space=smem, size = 0x4, offset = 0x4, fixed_abs, tag = 'smem constant byte address 0x4 - core index']
  #allocation1 [shape = 'u32[72,128]{1,0:T(1,128)}', space=vmem, size = 0x9000, scoped, tag = 'internal scratch']
  %s0 = inlined_call_operand.vmem [shape: f32[4,8,32], index: 0, kind: input, shape index: {}]
  %s1 = inlined_call_operand.hbm [shape: bf16[32,192], index: 1, kind: input, shape index: {}]
  %s2 = inlined_call_operand.vmem [shape: f32[1,192], index: 2, kind: input, shape index: {}]
  %s3 = inlined_call_operand.vmem [shape: bf16[64,32], index: 3, kind: input, shape index: {}]
  %s4 = inlined_call_operand.vmem [shape: f32[1,32], index: 4, kind: input, shape index: {}]
  %s5 = inlined_call_operand.hbm [shape: f32[4,8,32], index: 5, kind: output, shape index: {}]
  %s6 = sld [smem:[#allocation0]]
  $region57: #{tpu_custom_call.1} parent=0
    _
  %s8 = ssub.s32 1, %s6
  %s9 = scalar_select 0, %s8, %s6
  $region1: #{tpu_custom_call.1} parent=0
    #allocation2 [shape = 'u8[16384]{0}', space=vmem, size = 0x4000, scoped, tag = 'input window, operand 1, single buffered']
    #allocation3 [shape = 's32[2]{0}', space=sflag, size = 0x8, scoped, tag = 'scoped memory for tpu_custom_call.1']
    #allocation4 [shape = 's32[2]{0}', space=sflag, size = 0x8, scoped, tag = 'scoped memory for tpu_custom_call.1']
    #allocation5 [shape = 'u8[16384]{0}', space=vmem, size = 0x4000, scoped, tag = 'output window, operand 0']
    %10 = vsyncpa [#allocation3], 0
    %11 = vsyncpa [#allocation4], 0
    %s12 = scalar_lea.sflag [#allocation4], 1
    %13 = vsyncpa %s12, 0
    loop: start=0, step=1, limit=4
    $region2: #{tpu_custom_call.1} parent=1 // loop_pre_header
      _
    $region3: #{tpu_custom_call.1} parent=1 // loop_header
      %s15 = sphi 0, %s19
      %p16 = scmp.ge.s32.totalorder %s15, 4
      %s25 = sphi 0, %s27
      %s28 = sphi 0, %s25
      %s29 = sphi 0, %s28
      %s45 = sphi 0, %s29
      %s49 = sphi 0, %s49
      %s51 = sphi 0, %s49
      %s52 = sphi 0, %s51
      %s66 = sphi 0, %s52
      %s70 = sphi 0, %s70
      %s72 = sphi 0, %s70
      %s73 = sphi 0, %s72
      %s87 = sphi 0, %s73
      %s91 = sphi 0, %s91
      %s93 = sphi 0, %s91
      %s94 = sphi 0, %s93
      %s108 = sphi 0, %s94
      %s112 = sphi 0, %s112
      %s114 = sphi 0, %s112
      %s115 = sphi 0, %s114
      %s129 = sphi 0, %s115
      %s135 = sphi 0, %s137
      %s138 = sphi 0, %s135
      %s139 = sphi 0, %s138
      %s155 = sphi 0, %s139
    $region4: #{tpu_custom_call.1} parent=1 // loop_header_branch
      %18 = sbr.rel (%p16) target = $region8
    $region5: #{tpu_custom_call.1} parent=1 // loop_body
      %s20 = ssub.s32 %s15, 1
      %s21 = ssub.s32 %s15, 2
      %s22 = sadd.s32 %s15, 1
      %s23 = ssub.s32 %s15, %s22
      %p24 = scmp.eq.s32.totalorder %s23, 0
      %s26 = sadd.s32 %s25, 1
      %s27 = scalar_select %p24, %s25, %s26
      %p30 = pneg %p24
      %p31 = scmp.eq.s32.totalorder %s15, 1
      %p32 = por %p30, %p31
      %p33 = scmp.ne.s32.totalorder %s25, %s28
      %p34 = scmp.eq.s32.totalorder %s15, 0
      %p35 = por %p33, %p34
      %p36 = scmp.ne.s32.totalorder %s25, %s28
      %p37 = scmp.eq.s32.totalorder %s20, 1
      %p38 = por %p36, %p37
      %p39 = scmp.ne.s32.totalorder %s28, %s29
      %p40 = scmp.eq.s32.totalorder %s20, 0
      %p41 = por %p39, %p40
      %p42 = scmp.ne.s32.totalorder %s28, %s29
      %p43 = scmp.eq.s32.totalorder %s21, 1
      %p44 = por %p42, %p43
      %p46 = scmp.ne.s32.totalorder %s29, %s45
      %p47 = scmp.eq.s32.totalorder %s21, 0
      %p48 = por %p46, %p47
      %s50 = sadd.s32 %s49, 1
      %p53 = scmp.eq.s32.totalorder %s15, 1
      %p54 = scmp.ne.s32.totalorder %s49, %s51
      %p55 = scmp.eq.s32.totalorder %s15, 0
      %p56 = por %p54, %p55
      %p57 = scmp.ne.s32.totalorder %s49, %s51
      %p58 = scmp.eq.s32.totalorder %s20, 1
      %p59 = por %p57, %p58
      %p60 = scmp.ne.s32.totalorder %s51, %s52
      %p61 = scmp.eq.s32.totalorder %s20, 0
      %p62 = por %p60, %p61
      %p63 = scmp.ne.s32.totalorder %s51, %s52
      %p64 = scmp.eq.s32.totalorder %s21, 1
      %p65 = por %p63, %p64
      %p67 = scmp.ne.s32.totalorder %s52, %s66
      %p68 = scmp.eq.s32.totalorder %s21, 0
      %p69 = por %p67, %p68
      %s71 = sadd.s32 %s70, 1
      %p74 = scmp.eq.s32.totalorder %s15, 1
      %p75 = scmp.ne.s32.totalorder %s70, %s72
      %p76 = scmp.eq.s32.totalorder %s15, 0
      %p77 = por %p75, %p76
      %p78 = scmp.ne.s32.totalorder %s70, %s72
      %p79 = scmp.eq.s32.totalorder %s20, 1
      %p80 = por %p78, %p79
      %p81 = scmp.ne.s32.totalorder %s72, %s73
      %p82 = scmp.eq.s32.totalorder %s20, 0
      %p83 = por %p81, %p82
      %p84 = scmp.ne.s32.totalorder %s72, %s73
      %p85 = scmp.eq.s32.totalorder %s21, 1
      %p86 = por %p84, %p85
      %p88 = scmp.ne.s32.totalorder %s73, %s87
      %p89 = scmp.eq.s32.totalorder %s21, 0
      %p90 = por %p88, %p89
      %s92 = sadd.s32 %s91, 1
      %p95 = scmp.eq.s32.totalorder %s15, 1
      %p96 = scmp.ne.s32.totalorder %s91, %s93
      %p97 = scmp.eq.s32.totalorder %s15, 0
      %p98 = por %p96, %p97
      %p99 = scmp.ne.s32.totalorder %s91, %s93
      %p100 = scmp.eq.s32.totalorder %s20, 1
      %p101 = por %p99, %p100
      %p102 = scmp.ne.s32.totalorder %s93, %s94
      %p103 = scmp.eq.s32.totalorder %s20, 0
      %p104 = por %p102, %p103
      %p105 = scmp.ne.s32.totalorder %s93, %s94
      %p106 = scmp.eq.s32.totalorder %s21, 1
      %p107 = por %p105, %p106
      %p109 = scmp.ne.s32.totalorder %s94, %s108
      %p110 = scmp.eq.s32.totalorder %s21, 0
      %p111 = por %p109, %p110
      %s113 = sadd.s32 %s112, 1
      %p116 = scmp.eq.s32.totalorder %s15, 1
      %p117 = scmp.ne.s32.totalorder %s112, %s114
      %p118 = scmp.eq.s32.totalorder %s15, 0
      %p119 = por %p117, %p118
      %p120 = scmp.ne.s32.totalorder %s112, %s114
      %p121 = scmp.eq.s32.totalorder %s20, 1
      %p122 = por %p120, %p121
      %p123 = scmp.ne.s32.totalorder %s114, %s115
      %p124 = scmp.eq.s32.totalorder %s20, 0
      %p125 = por %p123, %p124
      %p126 = scmp.ne.s32.totalorder %s114, %s115
      %p127 = scmp.eq.s32.totalorder %s21, 1
      %p128 = por %p126, %p127
      %p130 = scmp.ne.s32.totalorder %s115, %s129
      %p131 = scmp.eq.s32.totalorder %s21, 0
      %p132 = por %p130, %p131
      %s133 = ssub.s32 %s15, %s22
      %p134 = scmp.eq.s32.totalorder %s133, 0
      %s136 = sadd.s32 %s135, 1
      %s137 = scalar_select %p134, %s135, %s136
      %p140 = pneg %p134
      %p141 = scmp.eq.s32.totalorder %s15, 1
      %p142 = por %p140, %p141
      %p143 = scmp.ne.s32.totalorder %s135, %s138
      %p144 = scmp.eq.s32.totalorder %s15, 0
      %p145 = por %p143, %p144
      %p146 = scmp.ne.s32.totalorder %s135, %s138
      %p147 = scmp.eq.s32.totalorder %s20, 1
      %p148 = por %p146, %p147
      %p149 = scmp.ne.s32.totalorder %s138, %s139
      %p150 = scmp.eq.s32.totalorder %s20, 0
      %p151 = por %p149, %p150
      %p152 = scmp.ne.s32.totalorder %s138, %s139
      %p153 = scmp.eq.s32.totalorder %s21, 1
      %p154 = por %p152, %p153
      %p156 = scmp.ne.s32.totalorder %s139, %s155
      %p157 = scmp.eq.s32.totalorder %s21, 0
      %p158 = por %p156, %p157
      %p159 = scmp.le.s32.totalorder 1, %s15
      %p160 = scmp.lt.s32.totalorder %s15, 3
      %p161 = pnand %p159, %p160
      %p162 = pneg %p161
      // Predicated region
      $region9: #{tpu_custom_call.1} parent=5 // pred_check
        _
      $region10: #{tpu_custom_call.1} parent=5 // pred_check_branch
        %164 = sbr.rel (%p161) target = $region12
      $region11: #{tpu_custom_call.1} parent=5 // pred_region
        %s165 = ssub.s32 %s15, 1
        // Predicated region
        $region13: #{tpu_custom_call.1} parent=11 // pred_check
          %p166 = pneg %p62
        $region14: #{tpu_custom_call.1} parent=11 // pred_check_branch
          %168 = sbr.rel (%p166) target = $region16
        $region15: #{tpu_custom_call.1} parent=11 // pred_region
          %170 = vsyncadd [#allocation3], 0
          %s171 = sshll.u32 %s1, 4
          %s172 = int_to_ptr.hbm [resolvable:$true] %s171
          %s173 = sshll.u32 [#allocation2], 4
          %s174 = int_to_ptr.vmem [resolvable:$true] %s173
          %179 = dma.hbm_to_vmem [thread:$0]  %s172, 512, %s174, [#allocation3], 128, 128, 8
        $region16: #{tpu_custom_call.1} parent=11 // pred_fallthru
          _
        // Predicated region
        $region17: #{tpu_custom_call.1} parent=11 // pred_check
          %p180 = pneg %p83
        $region18: #{tpu_custom_call.1} parent=11 // pred_check_branch
          %182 = sbr.rel (%p180) target = $region20
        $region19: #{tpu_custom_call.1} parent=11 // pred_region
          _
        $region20: #{tpu_custom_call.1} parent=11 // pred_fallthru
          _
        // Predicated region
        $region21: #{tpu_custom_call.1} parent=11 // pred_check
          %p183 = pneg %p104
        $region22: #{tpu_custom_call.1} parent=11 // pred_check_branch
          %185 = sbr.rel (%p183) target = $region24
        $region23: #{tpu_custom_call.1} parent=11 // pred_region
          _
        $region24: #{tpu_custom_call.1} parent=11 // pred_fallthru
          _
        // Predicated region
        $region25: #{tpu_custom_call.1} parent=11 // pred_check
          %p186 = pneg %p125
        $region26: #{tpu_custom_call.1} parent=11 // pred_check_branch
          %188 = sbr.rel (%p186) target = $region28
        $region27: #{tpu_custom_call.1} parent=11 // pred_region
          _
        $region28: #{tpu_custom_call.1} parent=11 // pred_fallthru
          _
      $region12: #{tpu_custom_call.1} parent=5 // pred_fallthru
        _
      %p189 = scmp.lt.s32.totalorder %s15, 2
      // Predicated region
      $region29: #{tpu_custom_call.1} parent=5 // pred_check
        %p190 = pneg %p189
      $region30: #{tpu_custom_call.1} parent=5 // pred_check_branch
        %192 = sbr.rel (%p190) target = $region32
      $region31: #{tpu_custom_call.1} parent=5 // pred_region
        // Predicated region
        $region33: #{tpu_custom_call.1} parent=31 // pred_check
          %p193 = pneg %p35
        $region34: #{tpu_custom_call.1} parent=31 // pred_check_branch
          %195 = sbr.rel (%p193) target = $region36
        $region35: #{tpu_custom_call.1} parent=31 // pred_region
          %s196 = smul.u32 2, %s15
          %p197 = scmp.lt.s32.totalorder %s196, 3
          %s198 = scalar_select %p197, %s196, 3
          %s199 = smul.addr %s198, 8
          %s200 = scalar_lea.vmem %s0, %s199
          %s201 = smul.u32 2, %s15
        $region36: #{tpu_custom_call.1} parent=31 // pred_fallthru
          _
      $region32: #{tpu_custom_call.1} parent=5 // pred_fallthru
        _
      %p202 = scmp.le.s32.totalorder 1, %s15
      %p203 = scmp.lt.s32.totalorder %s15, 3
      %p204 = pnand %p202, %p203
      %p205 = pneg %p204
      // Predicated region
      $region37: #{tpu_custom_call.1} parent=5 // pred_check
        _
      $region38: #{tpu_custom_call.1} parent=5 // pred_check_branch
        %207 = sbr.rel (%p204) target = $region40
      $region39: #{tpu_custom_call.1} parent=5 // pred_region
        %s208 = ssub.s32 %s15, 1
        // Predicated region
        $region41: #{tpu_custom_call.1} parent=39 // pred_check
          %p209 = pneg %p62
        $region42: #{tpu_custom_call.1} parent=39 // pred_check_branch
          %211 = sbr.rel (%p209) target = $region44
        $region43: #{tpu_custom_call.1} parent=39 // pred_region
          %213 = dma.done [#allocation3], 512
        $region44: #{tpu_custom_call.1} parent=39 // pred_fallthru
          _
        %s214 = smul.u32 2, %s20
        %p215 = scmp.lt.s32.totalorder %s214, 3
        %s216 = scalar_select %p215, %s214, 3
        %s217 = smul.addr %s216, 8
        %s218 = scalar_lea.vmem %s0, %s217
        %p219 = pneg %p41
        %p220 = pneg %p38
        %p221 = pneg %p62
        %p222 = pneg %p59
        %p223 = pneg %p83
        %p224 = pneg %p80
        %p225 = pneg %p104
        %p226 = pneg %p101
        %p227 = pneg %p125
        %p228 = pneg %p122
        %p229 = pneg %p151
        %p230 = pneg %p148
        %s231 = sand.u32 %s138, 1
        %s232 = scalar_lea.sflag [#allocation4], %s231
        %s233 = sand.u32 %s138, 1
        %s234 = smul.addr %s233, 16
        %s235 = scalar_lea.vmem [#allocation5], %s234
        %s236 = smul.u32 2, %s20
        %p237 = scmp.lt.s32.totalorder %s236, 3
        %s238 = scalar_select %p237, %s236, 3
        %s239 = smul.addr %s238, 8
        %s240 = scalar_lea.vmem %s0, %s239
        %s241 = smul.u32 2, %s20
        %s242 = smul.u32 2, %s20
        %v244 = vld [vmem:[%s240] sm:$0xff]
        %v245 = vld [vmem:[%s240 + $0x8] sm:$0xff]
        %v246 = vpack.c.bf16 %v245, %v244
        %v247 = vld [vmem:[#allocation2] sm:$0xff]
        %v248 = vld [vmem:[#allocation2 + $0x8] sm:$0xff]
        %v249 = vld [vmem:[#allocation2 + $0x10] sm:$0xff]
        %v250 = vld [vmem:[#allocation2 + $0x18] sm:$0xff]
        %v251 = vld [vmem:[%s2] sm:$0x3]
        %v253 = vperm.slane %v251, 0
        %v254 = vperm.slane %v251, 1
        %v261 = vunpack.c.l.b16 %v247
        %v262 = vunpack.c.h.b16 %v247
        %v263 = vunpack.c.l.b16 %v248
        %v264 = vunpack.c.h.b16 %v248
        %v265 = vunpack.c.l.b16 %v249
        %v266 = vunpack.c.h.b16 %v249
        %v267 = vunpack.c.l.b16 %v250
        %v268 = vunpack.c.h.b16 %v250
        %v269 = vpack.c.b16 %v263, %v261
        %v270 = vpack.c.b16 %v264, %v262
        %v271 = vpack.c.b16 %v267, %v265
        %v272 = vpack.c.b16 %v268, %v266
        %vm277 = vcmask 261120
        %v279 = vsel %vm277, %v246, 0
        %281 = vmatpush.bf16.msra.mxu0 0
        %282 = vmatpush.bf16.msra.mxu0 0
        %283 = vmatpush.bf16.msra.mxu0 0
        %284 = vmatpush.bf16.msra.mxu0 0
        %285 = vmatpush.bf16.msra.mxu0 0
        %286 = vmatpush.bf16.msra.mxu0 0
        %287 = vmatpush.bf16.msra.mxu0 %v271
        %288 = vmatpush.bf16.msra.mxu0 %v269
        %289 = vmatmul.bf16.gmra.mxu0 %v279
        %v290 = vpop.f32.mrf.mxu0
        %v291 = vadd.f32 %v253, %v290
        %v292 = vpop.f32.mrf.mxu0
        %v293 = vadd.f32 %v253, %v292
        %294 = vdwg.mxu0
        %295 = vmatpush.bf16.msra.mxu0 0
        %296 = vmatpush.bf16.msra.mxu0 0
        %297 = vmatpush.bf16.msra.mxu0 0
        %298 = vmatpush.bf16.msra.mxu0 0
        %299 = vmatpush.bf16.msra.mxu0 0
        %300 = vmatpush.bf16.msra.mxu0 0
        %301 = vmatpush.bf16.msra.mxu0 %v272
        %302 = vmatpush.bf16.msra.mxu0 %v270
        %303 = vmatmul.bf16.gmra.mxu0 %v279
        %v304 = vpop.f32.mrf.mxu0
        %v305 = vadd.f32 %v254, %v304
        %v306 = vpop.f32.mrf.mxu0
        %v307 = vadd.f32 %v254, %v306
        %308 = vdwg.mxu0
        %v309 = vpack.c.bf16 %v291, %v291
        %v310 = vpack.c.bf16 %v293, %v293
        %v311 = vpack.c.bf16 %v305, %v305
        %v312 = vpack.c.bf16 %v307, %v307
        %v314 = vunpack.c.l.b16 %v309
        %v315 = vpack.c.b16 %v314, %v314
        %316 = vrot.lane.b32.xlu0 %v315, 64
        %v317 = vpop.permute.xlu0 %316
        %vm318 = vcmask 130048
        %v320 = vsel %vm318, %v309, 0
        %v323 = vsel %vm318, %v317, 0
        %325 = vmatpush.bf16.xpose.msra.mxu0 0
        %326 = vmatpush.bf16.xpose.msra.mxu0 0
        %327 = vmatpush.bf16.xpose.msra.mxu0 0
        %328 = vmatpush.bf16.xpose.msra.mxu0 0
        %329 = vmatpush.bf16.xpose.msra.mxu0 0
        %330 = vmatpush.bf16.xpose.msra.mxu0 0
        %331 = vmatpush.bf16.xpose.msra.mxu0 0
        %332 = vmatpush.bf16.xpose.msra.mxu0 %v323
        %333 = vmatmul.bf16.gmra.mxu0 %v320
        %v334 = vpop.f32.mrf.mxu0
        %v335 = vadd.f32 0.0, %v334
        %v336 = vpop.f32.mrf.mxu0
        %337 = vdwg.mxu0
        %v339 = vunpack.c.l.b16 %v310
        %v340 = vpack.c.b16 %v339, %v339
        %341 = vrot.lane.b32.xlu0 %v340, 64
        %v342 = vpop.permute.xlu0 %341
        %v344 = vsel %vm318, %v310, 0
        %v347 = vsel %vm318, %v342, 0
        %349 = vmatpush.bf16.xpose.msra.mxu0 0
        %350 = vmatpush.bf16.xpose.msra.mxu0 0
        %351 = vmatpush.bf16.xpose.msra.mxu0 0
        %352 = vmatpush.bf16.xpose.msra.mxu0 0
        %353 = vmatpush.bf16.xpose.msra.mxu0 0
        %354 = vmatpush.bf16.xpose.msra.mxu0 0
        %355 = vmatpush.bf16.xpose.msra.mxu0 0
        %356 = vmatpush.bf16.xpose.msra.mxu0 %v347
        %357 = vmatmul.bf16.gmra.mxu0 %v344
        %v358 = vpop.f32.mrf.mxu0
        %v359 = vadd.f32 0.0, %v358
        %v360 = vpop.f32.mrf.mxu0
        %361 = vdwg.mxu0
        %vm362 = vcmask 64512
        %v363 = vsel %vm362, %v335, -inf
        %364 = vmax.xlane.f32.xlu0 %v363
        %v365 = vpop.xlane.xlu0 %364
        %v366 = vsel %vm362, %v359, -inf
        %367 = vmax.xlane.f32.xlu0 %v366
        %v368 = vpop.xlane.xlu0 %367
        %v369 = vsub.f32 %v335, %v365
        %v370 = vsub.f32 %v359, %v368
        %v371 = vmul.f32 %v369, 1.442695
        %v372 = vpow.pop %v371
        %v373 = vmul.f32 %v370, 1.442695
        %v374 = vpow.pop %v373
        %v375 = vsel %vm362, %v372, 0.0
        %376 = vadd.xlane.f32.xlu0 %v375
        %v377 = vpop.xlane.xlu0 %376
        %v378 = vsel %vm362, %v374, 0.0
        %379 = vadd.xlane.f32.xlu0 %v378
        %v380 = vpop.xlane.xlu0 %379
        %v381 = vrcp.pop %v377
        %v382 = vrcp.pop %v380
        %v383 = vmul.f32 %v372, %v381
        %v384 = vmul.f32 %v374, %v382
        %v385 = vpack.c.bf16 %v383, %v383
        %v386 = vpack.c.bf16 %v384, %v384
        %v388 = vsel %vm362, %v385, 0
        %vm390 = vcmask 1043456
        %v392 = vsel %vm390, %v311, 0
        %394 = vmatpush.bf16.msra.mxu0 0
        %395 = vmatpush.bf16.msra.mxu0 0
        %396 = vmatpush.bf16.msra.mxu0 0
        %397 = vmatpush.bf16.msra.mxu0 0
        %398 = vmatpush.bf16.msra.mxu0 0
        %399 = vmatpush.bf16.msra.mxu0 0
        %400 = vmatpush.bf16.msra.mxu0 0
        %401 = vmatpush.bf16.msra.mxu0 %v392
        %402 = vmatmul.bf16.gmra.mxu0 %v388
        %v403 = vpop.f32.mrf.mxu0
        %v404 = vadd.f32 0.0, %v403
        %v405 = vpop.f32.mrf.mxu0
        %406 = vdwg.mxu0
        %v408 = vsel %vm362, %v386, 0
        %v411 = vsel %vm390, %v312, 0
        %413 = vmatpush.bf16.msra.mxu0 0
        %414 = vmatpush.bf16.msra.mxu0 0
        %415 = vmatpush.bf16.msra.mxu0 0
        %416 = vmatpush.bf16.msra.mxu0 0
        %417 = vmatpush.bf16.msra.mxu0 0
        %418 = vmatpush.bf16.msra.mxu0 0
        %419 = vmatpush.bf16.msra.mxu0 0
        %420 = vmatpush.bf16.msra.mxu0 %v411
        %421 = vmatmul.bf16.gmra.mxu0 %v408
        %v422 = vpop.f32.mrf.mxu0
        %v423 = vadd.f32 0.0, %v422
        %v424 = vpop.f32.mrf.mxu0
        %425 = vdwg.mxu0
        %v426 = vpack.c.bf16 %v423, %v404
        %v427 = vld [vmem:[%s3] sm:$0xf]
        %v428 = vld [vmem:[%s3 + $0x4] sm:$0xf]
        %429 = vrot.lane.b32.xlu0 %v315, 112
        %v430 = vpop.permute.xlu0 %429
        %431 = vrot.lane.b32.xlu0 %v315, 48
        %v432 = vpop.permute.xlu0 %431
        %v434 = vsel %vm318, %v430, 0
        %v437 = vsel %vm318, %v432, 0
        %439 = vmatpush.bf16.xpose.msra.mxu0 0
        %440 = vmatpush.bf16.xpose.msra.mxu0 0
        %441 = vmatpush.bf16.xpose.msra.mxu0 0
        %442 = vmatpush.bf16.xpose.msra.mxu0 0
        %443 = vmatpush.bf16.xpose.msra.mxu0 0
        %444 = vmatpush.bf16.xpose.msra.mxu0 0
        %445 = vmatpush.bf16.xpose.msra.mxu0 0
        %446 = vmatpush.bf16.xpose.msra.mxu0 %v437
        %447 = vmatmul.bf16.gmra.mxu0 %v434
        %v448 = vpop.f32.mrf.mxu0
        %v449 = vadd.f32 0.0, %v448
        %v450 = vpop.f32.mrf.mxu0
        %451 = vdwg.mxu0
        %452 = vrot.lane.b32.xlu0 %v340, 112
        %v453 = vpop.permute.xlu0 %452
        %454 = vrot.lane.b32.xlu0 %v340, 48
        %v455 = vpop.permute.xlu0 %454
        %v457 = vsel %vm318, %v453, 0
        %v460 = vsel %vm318, %v455, 0
        %462 = vmatpush.bf16.xpose.msra.mxu0 0
        %463 = vmatpush.bf16.xpose.msra.mxu0 0
        %464 = vmatpush.bf16.xpose.msra.mxu0 0
        %465 = vmatpush.bf16.xpose.msra.mxu0 0
        %466 = vmatpush.bf16.xpose.msra.mxu0 0
        %467 = vmatpush.bf16.xpose.msra.mxu0 0
        %468 = vmatpush.bf16.xpose.msra.mxu0 0
        %469 = vmatpush.bf16.xpose.msra.mxu0 %v460
        %470 = vmatmul.bf16.gmra.mxu0 %v457
        %v471 = vpop.f32.mrf.mxu0
        %v472 = vadd.f32 0.0, %v471
        %v473 = vpop.f32.mrf.mxu0
        %474 = vdwg.mxu0
        %v475 = vsel %vm362, %v449, -inf
        %476 = vmax.xlane.f32.xlu0 %v475
        %v477 = vpop.xlane.xlu0 %476
        %v478 = vsel %vm362, %v472, -inf
        %479 = vmax.xlane.f32.xlu0 %v478
        %v480 = vpop.xlane.xlu0 %479
        %v481 = vsub.f32 %v449, %v477
        %v482 = vsub.f32 %v472, %v480
        %v483 = vmul.f32 %v481, 1.442695
        %v484 = vpow.pop %v483
        %v485 = vmul.f32 %v482, 1.442695
        %v486 = vpow.pop %v485
        %v487 = vsel %vm362, %v484, 0.0
        %488 = vadd.xlane.f32.xlu0 %v487
        %v489 = vpop.xlane.xlu0 %488
        %v490 = vsel %vm362, %v486, 0.0
        %491 = vadd.xlane.f32.xlu0 %v490
        %v492 = vpop.xlane.xlu0 %491
        %v493 = vrcp.pop %v489
        %v494 = vrcp.pop %v492
        %v495 = vmul.f32 %v484, %v493
        %v496 = vmul.f32 %v486, %v494
        %v497 = vpack.c.bf16 %v495, %v495
        %v498 = vpack.c.bf16 %v496, %v496
        %v500 = vunpack.c.l.b16 %v311
        %v501 = vpack.c.b16 %v500, %v500
        %502 = vrot.lane.b32.xlu0 %v501, 112
        %v503 = vpop.permute.xlu0 %502
        %v505 = vsel %vm362, %v497, 0
        %v508 = vsel %vm390, %v503, 0
        %510 = vmatpush.bf16.msra.mxu0 0
        %511 = vmatpush.bf16.msra.mxu0 0
        %512 = vmatpush.bf16.msra.mxu0 0
        %513 = vmatpush.bf16.msra.mxu0 0
        %514 = vmatpush.bf16.msra.mxu0 0
        %515 = vmatpush.bf16.msra.mxu0 0
        %516 = vmatpush.bf16.msra.mxu0 0
        %517 = vmatpush.bf16.msra.mxu0 %v508
        %518 = vmatmul.bf16.gmra.mxu0 %v505
        %v519 = vpop.f32.mrf.mxu0
        %v520 = vadd.f32 0.0, %v519
        %v521 = vpop.f32.mrf.mxu0
        %522 = vdwg.mxu0
        %v524 = vunpack.c.l.b16 %v312
        %v525 = vpack.c.b16 %v524, %v524
        %526 = vrot.lane.b32.xlu0 %v525, 112
        %v527 = vpop.permute.xlu0 %526
        %v529 = vsel %vm362, %v498, 0
        %v532 = vsel %vm390, %v527, 0
        %534 = vmatpush.bf16.msra.mxu0 0
        %535 = vmatpush.bf16.msra.mxu0 0
        %536 = vmatpush.bf16.msra.mxu0 0
        %537 = vmatpush.bf16.msra.mxu0 0
        %538 = vmatpush.bf16.msra.mxu0 0
        %539 = vmatpush.bf16.msra.mxu0 0
        %540 = vmatpush.bf16.msra.mxu0 0
        %541 = vmatpush.bf16.msra.mxu0 %v532
        %542 = vmatmul.bf16.gmra.mxu0 %v529
        %v543 = vpop.f32.mrf.mxu0
        %v544 = vadd.f32 0.0, %v543
        %v545 = vpop.f32.mrf.mxu0
        %546 = vdwg.mxu0
        %v547 = vpack.c.bf16 %v544, %v520
        %v548 = vld [vmem:[%s3 + $0x8] sm:$0xf]
        %v549 = vld [vmem:[%s3 + $0xc] sm:$0xf]
        %v552 = vunpack.c.l.b16 %v548
        %v553 = vunpack.c.l.b16 %v549
        %v554 = vpack.c.b16 %v553, %v552
        %v557 = vsel %vm318, %v547, 0
        %559 = vmatpush.bf16.msra.mxu0 0
        %560 = vmatpush.bf16.msra.mxu0 0
        %561 = vmatpush.bf16.msra.mxu0 0
        %562 = vmatpush.bf16.msra.mxu0 0
        %563 = vmatpush.bf16.msra.mxu0 0
        %564 = vmatpush.bf16.msra.mxu0 0
        %565 = vmatpush.bf16.msra.mxu0 0
        %566 = vmatpush.bf16.msra.mxu0 %v554
        %567 = vmatmul.bf16.gmra.mxu0 %v557
        %v568 = vpop.f32.mrf.mxu0
        %v569 = vadd.f32 0.0, %v568
        %v570 = vpop.f32.mrf.mxu0
        %v571 = vadd.f32 0.0, %v570
        %572 = vdwg.mxu0
        %v575 = vunpack.c.l.b16 %v427
        %v576 = vunpack.c.l.b16 %v428
        %v577 = vpack.c.b16 %v576, %v575
        %v580 = vsel %vm318, %v426, 0
        %582 = vmatpush.bf16.msra.mxu0 0
        %583 = vmatpush.bf16.msra.mxu0 0
        %584 = vmatpush.bf16.msra.mxu0 0
        %585 = vmatpush.bf16.msra.mxu0 0
        %586 = vmatpush.bf16.msra.mxu0 0
        %587 = vmatpush.bf16.msra.mxu0 0
        %588 = vmatpush.bf16.msra.mxu0 0
        %589 = vmatpush.bf16.msra.mxu0 %v577
        %590 = vmatmul.bf16.gmra.mxu0 %v580
        %v591 = vpop.f32.mrf.mxu0
        %v592 = vadd.f32 %v569, %v591
        %v593 = vpop.f32.mrf.mxu0
        %v594 = vadd.f32 %v571, %v593
        %595 = vdwg.mxu0
        %596 = vrot.lane.b32.xlu0 %v315, 96
        %v597 = vpop.permute.xlu0 %596
        %598 = vrot.lane.b32.xlu0 %v315, 32
        %v599 = vpop.permute.xlu0 %598
        %v601 = vsel %vm318, %v597, 0
        %v604 = vsel %vm318, %v599, 0
        %606 = vmatpush.bf16.xpose.msra.mxu0 0
        %607 = vmatpush.bf16.xpose.msra.mxu0 0
        %608 = vmatpush.bf16.xpose.msra.mxu0 0
        %609 = vmatpush.bf16.xpose.msra.mxu0 0
        %610 = vmatpush.bf16.xpose.msra.mxu0 0
        %611 = vmatpush.bf16.xpose.msra.mxu0 0
        %612 = vmatpush.bf16.xpose.msra.mxu0 0
        %613 = vmatpush.bf16.xpose.msra.mxu0 %v604
        %614 = vmatmul.bf16.gmra.mxu0 %v601
        %v615 = vpop.f32.mrf.mxu0
        %v616 = vadd.f32 0.0, %v615
        %v617 = vpop.f32.mrf.mxu0
        %618 = vdwg.mxu0
        %619 = vrot.lane.b32.xlu0 %v340, 96
        %v620 = vpop.permute.xlu0 %619
        %621 = vrot.lane.b32.xlu0 %v340, 32
        %v622 = vpop.permute.xlu0 %621
        %v624 = vsel %vm318, %v620, 0
        %v627 = vsel %vm318, %v622, 0
        %629 = vmatpush.bf16.xpose.msra.mxu0 0
        %630 = vmatpush.bf16.xpose.msra.mxu0 0
        %631 = vmatpush.bf16.xpose.msra.mxu0 0
        %632 = vmatpush.bf16.xpose.msra.mxu0 0
        %633 = vmatpush.bf16.xpose.msra.mxu0 0
        %634 = vmatpush.bf16.xpose.msra.mxu0 0
        %635 = vmatpush.bf16.xpose.msra.mxu0 0
        %636 = vmatpush.bf16.xpose.msra.mxu0 %v627
        %637 = vmatmul.bf16.gmra.mxu0 %v624
        %v638 = vpop.f32.mrf.mxu0
        %v639 = vadd.f32 0.0, %v638
        %v640 = vpop.f32.mrf.mxu0
        %641 = vdwg.mxu0
        %v642 = vsel %vm362, %v616, -inf
        %643 = vmax.xlane.f32.xlu0 %v642
        %v644 = vpop.xlane.xlu0 %643
        %v645 = vsel %vm362, %v639, -inf
        %646 = vmax.xlane.f32.xlu0 %v645
        %v647 = vpop.xlane.xlu0 %646
        %v648 = vsub.f32 %v616, %v644
        %v649 = vsub.f32 %v639, %v647
        %v650 = vmul.f32 %v648, 1.442695
        %v651 = vpow.pop %v650
        %v652 = vmul.f32 %v649, 1.442695
        %v653 = vpow.pop %v652
        %v654 = vsel %vm362, %v651, 0.0
        %655 = vadd.xlane.f32.xlu0 %v654
        %v656 = vpop.xlane.xlu0 %655
        %v657 = vsel %vm362, %v653, 0.0
        %658 = vadd.xlane.f32.xlu0 %v657
        %v659 = vpop.xlane.xlu0 %658
        %v660 = vrcp.pop %v656
        %v661 = vrcp.pop %v659
        %v662 = vmul.f32 %v651, %v660
        %v663 = vmul.f32 %v653, %v661
        %v664 = vpack.c.bf16 %v662, %v662
        %v665 = vpack.c.bf16 %v663, %v663
        %666 = vrot.lane.b32.xlu0 %v501, 96
        %v667 = vpop.permute.xlu0 %666
        %v669 = vsel %vm362, %v664, 0
        %v672 = vsel %vm390, %v667, 0
        %674 = vmatpush.bf16.msra.mxu0 0
        %675 = vmatpush.bf16.msra.mxu0 0
        %676 = vmatpush.bf16.msra.mxu0 0
        %677 = vmatpush.bf16.msra.mxu0 0
        %678 = vmatpush.bf16.msra.mxu0 0
        %679 = vmatpush.bf16.msra.mxu0 0
        %680 = vmatpush.bf16.msra.mxu0 0
        %681 = vmatpush.bf16.msra.mxu0 %v672
        %682 = vmatmul.bf16.gmra.mxu0 %v669
        %v683 = vpop.f32.mrf.mxu0
        %v684 = vadd.f32 0.0, %v683
        %v685 = vpop.f32.mrf.mxu0
        %686 = vdwg.mxu0
        %687 = vrot.lane.b32.xlu0 %v525, 96
        %v688 = vpop.permute.xlu0 %687
        %v690 = vsel %vm362, %v665, 0
        %v693 = vsel %vm390, %v688, 0
        %695 = vmatpush.bf16.msra.mxu0 0
        %696 = vmatpush.bf16.msra.mxu0 0
        %697 = vmatpush.bf16.msra.mxu0 0
        %698 = vmatpush.bf16.msra.mxu0 0
        %699 = vmatpush.bf16.msra.mxu0 0
        %700 = vmatpush.bf16.msra.mxu0 0
        %701 = vmatpush.bf16.msra.mxu0 0
        %702 = vmatpush.bf16.msra.mxu0 %v693
        %703 = vmatmul.bf16.gmra.mxu0 %v690
        %v704 = vpop.f32.mrf.mxu0
        %v705 = vadd.f32 0.0, %v704
        %v706 = vpop.f32.mrf.mxu0
        %707 = vdwg.mxu0
        %v708 = vpack.c.bf16 %v705, %v684
        %v709 = vld [vmem:[%s3 + $0x10] sm:$0xf]
        %v710 = vld [vmem:[%s3 + $0x14] sm:$0xf]
        %v713 = vunpack.c.l.b16 %v709
        %v714 = vunpack.c.l.b16 %v710
        %v715 = vpack.c.b16 %v714, %v713
        %v718 = vsel %vm318, %v708, 0
        %720 = vmatpush.bf16.msra.mxu0 0
        %721 = vmatpush.bf16.msra.mxu0 0
        %722 = vmatpush.bf16.msra.mxu0 0
        %723 = vmatpush.bf16.msra.mxu0 0
        %724 = vmatpush.bf16.msra.mxu0 0
        %725 = vmatpush.bf16.msra.mxu0 0
        %726 = vmatpush.bf16.msra.mxu0 0
        %727 = vmatpush.bf16.msra.mxu0 %v715
        %728 = vmatmul.bf16.gmra.mxu0 %v718
        %v729 = vpop.f32.mrf.mxu0
        %v730 = vadd.f32 0.0, %v729
        %v731 = vpop.f32.mrf.mxu0
        %v732 = vadd.f32 0.0, %v731
        %733 = vdwg.mxu0
        %v734 = vadd.f32 %v592, %v730
        %v735 = vadd.f32 %v594, %v732
        %736 = vrot.lane.b32.xlu0 %v315, 80
        %v737 = vpop.permute.xlu0 %736
        %738 = vrot.lane.b32.xlu0 %v315, 16
        %v739 = vpop.permute.xlu0 %738
        %v741 = vsel %vm318, %v737, 0
        %v744 = vsel %vm318, %v739, 0
        %746 = vmatpush.bf16.xpose.msra.mxu0 0
        %747 = vmatpush.bf16.xpose.msra.mxu0 0
        %748 = vmatpush.bf16.xpose.msra.mxu0 0
        %749 = vmatpush.bf16.xpose.msra.mxu0 0
        %750 = vmatpush.bf16.xpose.msra.mxu0 0
        %751 = vmatpush.bf16.xpose.msra.mxu0 0
        %752 = vmatpush.bf16.xpose.msra.mxu0 0
        %753 = vmatpush.bf16.xpose.msra.mxu0 %v744
        %754 = vmatmul.bf16.gmra.mxu0 %v741
        %v755 = vpop.f32.mrf.mxu0
        %v756 = vadd.f32 0.0, %v755
        %v757 = vpop.f32.mrf.mxu0
        %758 = vdwg.mxu0
        %759 = vrot.lane.b32.xlu0 %v340, 80
        %v760 = vpop.permute.xlu0 %759
        %761 = vrot.lane.b32.xlu0 %v340, 16
        %v762 = vpop.permute.xlu0 %761
        %v764 = vsel %vm318, %v760, 0
        %v767 = vsel %vm318, %v762, 0
        %769 = vmatpush.bf16.xpose.msra.mxu0 0
        %770 = vmatpush.bf16.xpose.msra.mxu0 0
        %771 = vmatpush.bf16.xpose.msra.mxu0 0
        %772 = vmatpush.bf16.xpose.msra.mxu0 0
        %773 = vmatpush.bf16.xpose.msra.mxu0 0
        %774 = vmatpush.bf16.xpose.msra.mxu0 0
        %775 = vmatpush.bf16.xpose.msra.mxu0 0
        %776 = vmatpush.bf16.xpose.msra.mxu0 %v767
        %777 = vmatmul.bf16.gmra.mxu0 %v764
        %v778 = vpop.f32.mrf.mxu0
        %v779 = vadd.f32 0.0, %v778
        %v780 = vpop.f32.mrf.mxu0
        %781 = vdwg.mxu0
        %v782 = vsel %vm362, %v756, -inf
        %783 = vmax.xlane.f32.xlu0 %v782
        %v784 = vpop.xlane.xlu0 %783
        %v785 = vsel %vm362, %v779, -inf
        %786 = vmax.xlane.f32.xlu0 %v785
        %v787 = vpop.xlane.xlu0 %786
        %v788 = vsub.f32 %v756, %v784
        %v789 = vsub.f32 %v779, %v787
        %v790 = vmul.f32 %v788, 1.442695
        %v791 = vpow.pop %v790
        %v792 = vmul.f32 %v789, 1.442695
        %v793 = vpow.pop %v792
        %v794 = vsel %vm362, %v791, 0.0
        %795 = vadd.xlane.f32.xlu0 %v794
        %v796 = vpop.xlane.xlu0 %795
        %v797 = vsel %vm362, %v793, 0.0
        %798 = vadd.xlane.f32.xlu0 %v797
        %v799 = vpop.xlane.xlu0 %798
        %v800 = vrcp.pop %v796
        %v801 = vrcp.pop %v799
        %v802 = vmul.f32 %v791, %v800
        %v803 = vmul.f32 %v793, %v801
        %v804 = vpack.c.bf16 %v802, %v802
        %v805 = vpack.c.bf16 %v803, %v803
        %806 = vrot.lane.b32.xlu0 %v501, 80
        %v807 = vpop.permute.xlu0 %806
        %v809 = vsel %vm362, %v804, 0
        %v812 = vsel %vm390, %v807, 0
        %814 = vmatpush.bf16.msra.mxu0 0
        %815 = vmatpush.bf16.msra.mxu0 0
        %816 = vmatpush.bf16.msra.mxu0 0
        %817 = vmatpush.bf16.msra.mxu0 0
        %818 = vmatpush.bf16.msra.mxu0 0
        %819 = vmatpush.bf16.msra.mxu0 0
        %820 = vmatpush.bf16.msra.mxu0 0
        %821 = vmatpush.bf16.msra.mxu0 %v812
        %822 = vmatmul.bf16.gmra.mxu0 %v809
        %v823 = vpop.f32.mrf.mxu0
        %v824 = vadd.f32 0.0, %v823
        %v825 = vpop.f32.mrf.mxu0
        %826 = vdwg.mxu0
        %827 = vrot.lane.b32.xlu0 %v525, 80
        %v828 = vpop.permute.xlu0 %827
        %v830 = vsel %vm362, %v805, 0
        %v833 = vsel %vm390, %v828, 0
        %835 = vmatpush.bf16.msra.mxu0 0
        %836 = vmatpush.bf16.msra.mxu0 0
        %837 = vmatpush.bf16.msra.mxu0 0
        %838 = vmatpush.bf16.msra.mxu0 0
        %839 = vmatpush.bf16.msra.mxu0 0
        %840 = vmatpush.bf16.msra.mxu0 0
        %841 = vmatpush.bf16.msra.mxu0 0
        %842 = vmatpush.bf16.msra.mxu0 %v833
        %843 = vmatmul.bf16.gmra.mxu0 %v830
        %v844 = vpop.f32.mrf.mxu0
        %v845 = vadd.f32 0.0, %v844
        %v846 = vpop.f32.mrf.mxu0
        %847 = vdwg.mxu0
        %v848 = vpack.c.bf16 %v845, %v824
        %v849 = vld [vmem:[%s3 + $0x18] sm:$0xf]
        %v850 = vld [vmem:[%s3 + $0x1c] sm:$0xf]
        %v853 = vunpack.c.l.b16 %v849
        %v854 = vunpack.c.l.b16 %v850
        %v855 = vpack.c.b16 %v854, %v853
        %v858 = vsel %vm318, %v848, 0
        %860 = vmatpush.bf16.msra.mxu0 0
        %861 = vmatpush.bf16.msra.mxu0 0
        %862 = vmatpush.bf16.msra.mxu0 0
        %863 = vmatpush.bf16.msra.mxu0 0
        %864 = vmatpush.bf16.msra.mxu0 0
        %865 = vmatpush.bf16.msra.mxu0 0
        %866 = vmatpush.bf16.msra.mxu0 0
        %867 = vmatpush.bf16.msra.mxu0 %v855
        %868 = vmatmul.bf16.gmra.mxu0 %v858
        %v869 = vpop.f32.mrf.mxu0
        %v870 = vadd.f32 0.0, %v869
        %v871 = vpop.f32.mrf.mxu0
        %v872 = vadd.f32 0.0, %v871
        %873 = vdwg.mxu0
        %v874 = vadd.f32 %v734, %v870
        %v875 = vadd.f32 %v735, %v872
        %v876 = vld [vmem:[%s4] sm:$0x1]
        %v878 = vperm.slane %v876, 0
        %v880 = vadd.f32 %v874, %v878
        %v881 = vadd.f32 %v875, %v878
        %882 = vst.msk [vmem:[%s235] sm:$0xff] %vm277, %v880
        %883 = vst.msk [vmem:[%s235 + $0x8] sm:$0xff] %vm277, %v881
        %s884 = sand.u32 %s138, 1
        %s885 = scalar_lea.sflag [#allocation4], %s884
        %s886 = sand.u32 %s138, 1
        %s887 = smul.addr %s886, 16
        %s888 = scalar_lea.vmem [#allocation5], %s887
        // Predicated region
        $region45: #{tpu_custom_call.1} parent=39 // pred_check
          %p889 = pneg %p148
        $region46: #{tpu_custom_call.1} parent=39 // pred_check_branch
          %891 = sbr.rel (%p889) target = $region48
        $region47: #{tpu_custom_call.1} parent=39 // pred_region
          %s892 = smul.u32 2, %s20
          %894 = vsyncadd %s885, 0
          %s895 = smul.addr %s892, 8
          %s896 = scalar_lea.hbm %s5, %s895
          %s897 = sshll.u32 %s888, 4
          %s898 = int_to_ptr.vmem [resolvable:$true] %s897
          %s899 = sshll.u32 %s896, 4
          %s900 = int_to_ptr.hbm [resolvable:$true] %s899
          %905 = dma.vmem_to_hbm [thread:$0]  %s898, 256, %s900, %s885, 128, 128, 8
        $region48: #{tpu_custom_call.1} parent=39 // pred_fallthru
          _
      $region40: #{tpu_custom_call.1} parent=5 // pred_fallthru
        _
      %p906 = scmp.le.s32.totalorder 2, %s15
      // Predicated region
      $region49: #{tpu_custom_call.1} parent=5 // pred_check
        %p907 = pneg %p906
      $region50: #{tpu_custom_call.1} parent=5 // pred_check_branch
        %909 = sbr.rel (%p907) target = $region52
      $region51: #{tpu_custom_call.1} parent=5 // pred_region
        %s910 = ssub.s32 %s15, 2
        // Predicated region
        $region53: #{tpu_custom_call.1} parent=51 // pred_check
          %p911 = pneg %p154
        $region54: #{tpu_custom_call.1} parent=51 // pred_check_branch
          %913 = sbr.rel (%p911) target = $region56
        $region55: #{tpu_custom_call.1} parent=51 // pred_region
          %s914 = sand.u32 %s139, 1
          %s915 = scalar_lea.sflag [#allocation4], %s914
          %s916 = sand.u32 %s139, 1
          %s917 = smul.addr %s916, 16
          %s918 = scalar_lea.vmem [#allocation5], %s917
          %920 = dma.done %s915, 256
        $region56: #{tpu_custom_call.1} parent=51 // pred_fallthru
          _
      $region52: #{tpu_custom_call.1} parent=5 // pred_fallthru
        _
    $region6: #{tpu_custom_call.1} parent=1 // loop_footer
      %s19 = sadd.s32 1, %s15
    $region7: #{tpu_custom_call.1} parent=1 // loop_footer_branch
      %14 = sbr.rel target = $region3
    $region8: #{tpu_custom_call.1} parent=1 // loop_exit
      _
    %921 = vsyncpa [#allocation3], 1
    %s922 = scalar_lea.sflag [#allocation3], 1
    %923 = vsyncpa %s922, 1
    %924 = vsyncpa [#allocation4], 1
    %s925 = scalar_lea.sflag [#allocation4], 1
    %926 = vsyncpa %s925, 1

</llo_original>
